<compile_context>
chip_gen: v5e
topology: v5e:2x2
jax: 0.10.0
libtpu: 0.0.40
codegen_flags: <defaults>
</compile_context>

<pallas_src>
import functools

import jax
import jax.numpy as jnp
from jax.experimental import pallas as pl
from jax.experimental.pallas import tpu as pltpu


def _round_up(a, b):
    return (a + b - 1) // b * b


def _ghmc_kernel(x_ref, tgt_ref, acc_in_ref, loss_ref, acc_out_ref, hist_ref,
                 *, bins, momentum, n_total, tile_n):
    """One grid step handles tile_n samples (lane-dense over N).

    Accumulate phase: one fused MXU matmul produces the per-bin [count, ce_sum]
    pair for the tile and adds it into the (bins, 2) VMEM accumulator.
    Finalize phase (last step): M, momentum EMA of acc_sum, weighted-CE mean.
    """
    step = pl.program_id(0)
    last = pl.num_programs(0) - 1

    @pl.when(step == 0)
    def _():
        hist_ref[...] = jnp.zeros_like(hist_ref)

    # ---- per-sample phase: everything is (1, tile_n), N on the lane axis ----
    x = x_ref[...].astype(jnp.float32)          # (2, tile_n) logits, class on sublanes
    tgt = tgt_ref[...]                          # (1, tile_n) int32 in {0, 1}

    # Closed-form binary CE: margin of the true class over the other class.
    m_raw = x[1:2, :] - x[0:1, :]               # (1, tile_n)
    m = jnp.where(tgt > 0, m_raw, -m_raw)       # margin x_true - x_other

    # g  = sum_c |softmax - onehot| / 2 = 1 - p_true = sigmoid(-m)
    # ce = -log_softmax[true class]     = softplus(-m)
    # (stable forms; exact divide on purpose — an approx reciprocal could push g
    #  across a histogram bin edge and change the binning vs. the reference).
    e = jnp.exp(-jnp.abs(m))
    g = jnp.where(m >= 0.0, e, 1.0) / (1.0 + e)               # sigmoid(-m)
    ce = jnp.maximum(-m, 0.0) + jnp.log(1.0 + e)              # softplus(-m)

    # Uniform edges (arange(bins+1)/bins, +1e-6 on the top edge): bin = floor(g*bins),
    # clipped so g == 1.0 lands in the top bin exactly like the torch edges do.
    bin_idx = jnp.clip(jnp.floor(g * bins).astype(jnp.int32), 0, bins - 1)

    if n_total % tile_n != 0:   # ragged last tile — lane-width masking only (static)
        lane = jax.lax.broadcasted_iota(jnp.int32, (1, tile_n), 1)
        valid = step * tile_n + lane < n_total
        bin_idx = jnp.where(valid, bin_idx, bins)    # pad lanes fall outside all bins
        ce = jnp.where(valid, ce, 0.0)               # pad garbage/NaN never reaches MXU

    # Per-bin one-hot, lane-dense over samples: (bins, tile_n).  Pad lanes -> all-zero.
    bin_iota = jax.lax.broadcasted_iota(jnp.int32, (bins, tile_n), 0)
    onehot_f = (bin_iota == bin_idx).astype(jnp.float32)

    # Fused histogram matmul (NT form, contraction over the lane axis of both):
    #   col 0 = per-bin sample count, col 1 = per-bin CE sum.
    rhs = jnp.concatenate([jnp.ones_like(ce), ce], axis=0)    # (2, tile_n)
    hist_ref[...] += jax.lax.dot_general(
        onehot_f, rhs, (((1,), (1,)), ((), ())),
        preferred_element_type=jnp.float32)                   # (bins, 2)

    # ---- finalize: histogram -> per-bin denominators -> weighted-CE mean ----
    @pl.when(step == last)
    def _():
        hist = hist_ref[...]                                  # (bins, 2)
        cnt = hist[:, 0:1]                                    # (bins, 1) raw counts
        ce_sum = hist[:, 1:2]                                 # (bins, 1)
        acc_old = acc_in_ref[...].astype(jnp.float32)         # (bins, 1)
        nonempty = cnt > 0.0
        m_val = jnp.sum(nonempty.astype(jnp.float32), keepdims=True)   # (1, 1) == M
        if momentum > 0:
            cnt_eff = jnp.where(nonempty, cnt, acc_old)
            acc_new = momentum * acc_old + (1.0 - momentum) * cnt_eff
            denom = acc_new
        else:
            acc_new = acc_old
            denom = cnt
        # Empty bins contribute nothing (guards the 0/0 case when acc_old == 0).
        per_bin = jnp.where(nonempty, ce_sum / denom, 0.0)
        loss_ref[...] = jnp.sum(per_bin, keepdims=True) / m_val
        acc_out_ref[...] = acc_new


def ghmc_loss_cn(x_cn, target, acc_sum, *, bins=30, momentum=0.75, num_class=2,
                 tile_n=1024):
    """Functional GHMCLoss.forward on (C, N)-layout logits. Returns (loss, new_acc_sum).

    tile_n is the primary tuning knob (sweep 512–2048 per TPU generation; vreg
    pressure of the (bins, tile_n) intermediates — not VMEM — is the ceiling).
    """
    C, N = x_cn.shape
    assert C == num_class
    # TODO(synk): only the default num_class == 2 is lowered (closed-form
    # sigmoid/softplus path); a general-C lane-transposed softmax kernel is not
    # implemented here.
    assert num_class == 2, "Pallas kernel implements the default binary case"
    assert tile_n % 128 == 0          # multiples of 256 preferred on v6e/v7x (MXU align)
    align = 256 if tile_n % 256 == 0 else 128
    tile_n = min(tile_n, _round_up(N, align))
    num_tiles = pl.cdiv(N, tile_n)

    # Layout plumbing only (free reshapes): lane-dense over samples.
    tgt = target.astype(jnp.int32).reshape(1, N)     # (1, N)
    acc = acc_sum.astype(jnp.float32).reshape(bins, 1)

    kernel = functools.partial(_ghmc_kernel, bins=bins, momentum=momentum,
                               n_total=N, tile_n=tile_n)
    grid_spec = pltpu.PrefetchScalarGridSpec(
        num_scalar_prefetch=0,
        grid=(num_tiles,),
        in_specs=[
            pl.BlockSpec((2, tile_n), lambda i: (0, i)),       # logits (C, tile_n)
            pl.BlockSpec((1, tile_n), lambda i: (0, i)),       # targets (1, tile_n)
            pl.BlockSpec((bins, 1), lambda i: (0, 0)),         # running acc_sum
        ],
        out_specs=(
            pl.BlockSpec((1, 1), lambda i: (0, 0)),            # loss
            pl.BlockSpec((bins, 1), lambda i: (0, 0)),         # new acc_sum
        ),
        scratch_shapes=[
            pltpu.VMEM((bins, 2), jnp.float32),                # [count, ce_sum] per bin
        ],
    )
    loss, acc_new = pl.pallas_call(
        kernel,
        out_shape=(jax.ShapeDtypeStruct((1, 1), jnp.float32),
                   jax.ShapeDtypeStruct((bins, 1), jnp.float32)),
        grid_spec=grid_spec,
        compiler_params=pltpu.CompilerParams(
            dimension_semantics=("arbitrary",),    # grid axis is a reduction over N
            vmem_limit_bytes=32 * 1024 * 1024,
        ),
    )(x_cn, tgt, acc)
    return loss[0, 0], acc_new.reshape(bins)


def ghmc_loss(x, target, acc_sum, **kwargs):
    """PyTorch-compatible entry point: x is (N, C) like GHMCLoss.forward.

    The transpose below is layout plumbing (one extra HBM copy of the 2xN logits);
    producers that can emit (C, N) directly should call ghmc_loss_cn to skip it.
    """
    return ghmc_loss_cn(jnp.transpose(x), target, acc_sum, **kwargs)


def _ghmc_loss_ref(x, target, acc_sum, *, bins=30, momentum=0.75, num_class=2):
    """Pure-JAX reference mirroring the PyTorch module (for verification)."""
    N, C = x.shape
    edges = jnp.arange(bins + 1, dtype=jnp.float32) / bins
    edges = edges.at[-1].add(1e-6)
    onehot = jax.nn.one_hot(target, num_class, dtype=jnp.float32)
    y = jax.nn.softmax(x, axis=1)
    grad = (y - onehot) / 2.0
    g = jnp.sum(jnp.abs(grad), axis=1)[:, None]
    g_bin = jnp.logical_and(g >= edges[None, :-1], g < edges[None, 1:])
    bin_idx = jnp.argmax(g_bin, axis=1)
    bin_count = jnp.sum(g_bin, axis=0).astype(jnp.float32)
    M = jnp.sum(bin_count > 0).astype(jnp.float32)
    if momentum > 0:
        bin_count = jnp.where(bin_count == 0, acc_sum, bin_count)
        acc_new = momentum * acc_sum + (1 - momentum) * bin_count
        weight = N / acc_new[bin_idx]
    else:
        acc_new = acc_sum
        weight = N / bin_count[bin_idx]
    weight = weight / M
    logp = jax.nn.log_softmax(x, axis=1)
    ce = -jnp.sum(onehot * logp, axis=1)
    return jnp.mean(ce * weight), acc_new


if __name__ == "__main__":
    key = jax.random.PRNGKey(0)
    N, C, bins = 1600, 2, 30      # 2 grid tiles of 1024 (second one ragged: 576 valid)
    k1, k2, k3, k4 = jax.random.split(key, 4)
    x = jax.random.normal(k1, (N, C), dtype=jnp.float32)
    target = jax.random.randint(k2, (N,), 0, C, dtype=jnp.int32)
    acc_sum0 = jnp.zeros((bins,), dtype=jnp.float32)   # module init: torch.zeros(bins)

    # Step 1: fresh accumulator.
    loss, acc1 = ghmc_loss(x, target, acc_sum0, bins=bins, momentum=0.75, num_class=C)
    jax.block_until_ready((loss, acc1))
    loss_ref, acc1_ref = _ghmc_loss_ref(x, target, acc_sum0, bins=bins,
                                        momentum=0.75, num_class=C)
    assert jnp.allclose(loss, loss_ref, rtol=2e-3, atol=1e-5), (loss, loss_ref)
    assert jnp.allclose(acc1, acc1_ref, rtol=2e-3, atol=1e-5)

    # Step 2: running (nonzero) acc_sum exercises the momentum EMA / empty-bin path.
    x2 = 2.5 * jax.random.normal(k3, (N, C), dtype=jnp.float32)
    target2 = jax.random.randint(k4, (N,), 0, C, dtype=jnp.int32)
    loss2, acc2 = ghmc_loss(x2, target2, acc1, bins=bins, momentum=0.75, num_class=C)
    jax.block_until_ready((loss2, acc2))
    loss2_ref, acc2_ref = _ghmc_loss_ref(x2, target2, acc1, bins=bins,
                                         momentum=0.75, num_class=C)
    assert jnp.allclose(loss2, loss2_ref, rtol=2e-3, atol=1e-5), (loss2, loss2_ref)
    assert jnp.allclose(acc2, acc2_ref, rtol=2e-3, atol=1e-5)

    print("KERNEL_OK")
</pallas_src>

<mosaic_0001>
module attributes {stable_mosaic.version = 11 : i64} {
  func.func @_ghmc_kernel(%arg0: i32, %arg1: memref<2x1024xf32, #tpu.memory_space<vmem>>, %arg2: memref<1x1024xi32, #tpu.memory_space<vmem>>, %arg3: memref<30x1xf32, #tpu.memory_space<vmem>>, %arg4: memref<1x1xf32, #tpu.memory_space<vmem>>, %arg5: memref<30x1xf32, #tpu.memory_space<vmem>>, %arg6: memref<30x2xf32, #tpu.memory_space<vmem>>) attributes {dimension_semantics = [#tpu.dimension_semantics<arbitrary>], iteration_bounds = array<i64: 2>, scalar_prefetch = 0 : i64, scratch_operands = 1 : i64, tpu.core_type = #tpu.core_type<tc>, window_params = [{transform_indices = @transform_0, window_bounds = array<i64: 2, 1024>}, {transform_indices = @transform_1, window_bounds = array<i64: 1, 1024>}, {pipeline_mode = #tpu.pipeline_mode<synchronous>, transform_indices = @transform_2, window_bounds = array<i64: 30, 1>}, {pipeline_mode = #tpu.pipeline_mode<synchronous>, transform_indices = @transform_3, window_bounds = array<i64: 1, 1>}, {pipeline_mode = #tpu.pipeline_mode<synchronous>, transform_indices = @transform_4, window_bounds = array<i64: 30, 1>}]} {
    %c0_i32 = arith.constant 0 : i32
    %0 = arith.cmpi eq, %arg0, %c0_i32 : i32
    %1 = arith.extui %0 : i1 to i32
    %c0_i32_0 = arith.constant 0 : i32
    %2 = arith.cmpi ne, %1, %c0_i32_0 : i32
    scf.if %2 {
      %cst_22 = arith.constant 0.000000e+00 : f32
      %64 = vector.broadcast %cst_22 : f32 to vector<30x2xf32>
      %c0_23 = arith.constant 0 : index
      %c0_24 = arith.constant 0 : index
      %65 = vector.load %arg6[%c0_23, %c0_24] : memref<30x2xf32, #tpu.memory_space<vmem>>, vector<30x2xf32>
      tpu.vector_store %arg6[%c0_23, %c0_24], %64 {strides = array<i32>} : memref<30x2xf32, #tpu.memory_space<vmem>>, vector<30x2xf32>,
    } else {
    }
    %c0 = arith.constant 0 : index
    %c0_1 = arith.constant 0 : index
    %3 = vector.load %arg1[%c0, %c0_1] : memref<2x1024xf32, #tpu.memory_space<vmem>>, vector<2x1024xf32>
    %c0_2 = arith.constant 0 : index
    %c0_3 = arith.constant 0 : index
    %4 = vector.load %arg2[%c0_2, %c0_3] : memref<1x1024xi32, #tpu.memory_space<vmem>>, vector<1x1024xi32>
    %5 = vector.extract_strided_slice %3 {offsets = [1, 0], sizes = [1, 1024], strides = [1, 1]} : vector<2x1024xf32> to vector<1x1024xf32>
    %6 = vector.extract_strided_slice %3 {offsets = [0, 0], sizes = [1, 1024], strides = [1, 1]} : vector<2x1024xf32> to vector<1x1024xf32>
    %7 = arith.subf %5, %6 : vector<1x1024xf32>
    %c0_i32_4 = arith.constant 0 : i32
    %8 = vector.broadcast %c0_i32_4 : i32 to vector<1x1024xi32>
    %9 = arith.cmpi sgt, %4, %8 : vector<1x1024xi32>
    %cst = arith.constant 0.000000e+00 : f32
    %10 = vector.broadcast %cst : f32 to vector<1x1024xf32>
    %11 = arith.subf %10, %7 : vector<1x1024xf32>
    %12 = arith.select %9, %7, %11 : vector<1x1024xi1>, vector<1x1024xf32>
    %13 = math.absf %12 : vector<1x1024xf32>
    %cst_5 = arith.constant 0.000000e+00 : f32
    %14 = vector.broadcast %cst_5 : f32 to vector<1x1024xf32>
    %15 = arith.subf %14, %13 : vector<1x1024xf32>
    %16 = math.exp %15 : vector<1x1024xf32>
    %cst_6 = arith.constant 0.000000e+00 : f32
    %17 = vector.broadcast %cst_6 : f32 to vector<1x1024xf32>
    %18 = arith.cmpf oge, %12, %17 : vector<1x1024xf32>
    %cst_7 = arith.constant 1.000000e+00 : f32
    %19 = vector.broadcast %cst_7 : f32 to vector<1x1024xf32>
    %20 = arith.select %18, %16, %19 : vector<1x1024xi1>, vector<1x1024xf32>
    %cst_8 = arith.constant 1.000000e+00 : f32
    %21 = vector.broadcast %cst_8 : f32 to vector<1x1024xf32>
    %22 = arith.addf %21, %16 : vector<1x1024xf32>
    %23 = arith.divf %20, %22 : vector<1x1024xf32>
    %cst_9 = arith.constant 0.000000e+00 : f32
    %24 = vector.broadcast %cst_9 : f32 to vector<1x1024xf32>
    %25 = arith.subf %24, %12 : vector<1x1024xf32>
    %cst_10 = arith.constant 0.000000e+00 : f32
    %26 = vector.broadcast %cst_10 : f32 to vector<1x1024xf32>
    %27 = arith.maximumf %25, %26 : vector<1x1024xf32>
    %cst_11 = arith.constant 1.000000e+00 : f32
    %28 = vector.broadcast %cst_11 : f32 to vector<1x1024xf32>
    %29 = arith.addf %28, %16 : vector<1x1024xf32>
    %30 = math.log %29 : vector<1x1024xf32>
    %31 = arith.addf %27, %30 : vector<1x1024xf32>
    %cst_12 = arith.constant 3.000000e+01 : f32
    %32 = vector.broadcast %cst_12 : f32 to vector<1x1024xf32>
    %33 = arith.mulf %23, %32 : vector<1x1024xf32>
    %34 = math.floor %33 : vector<1x1024xf32>
    %35 = arith.fptosi %34 : vector<1x1024xf32> to vector<1x1024xi32>
    %c0_i32_13 = arith.constant 0 : i32
    %c29_i32 = arith.constant 29 : i32
    %36 = vector.broadcast %c0_i32_13 : i32 to vector<1x1024xi32>
    %37 = arith.maxsi %36, %35 : vector<1x1024xi32>
    %38 = vector.broadcast %c29_i32 : i32 to vector<1x1024xi32>
    %39 = arith.minsi %38, %37 : vector<1x1024xi32>
    %40 = tpu.iota {dimensions = array<i32: 1>} : vector<1x1024xi32>
    %c1024_i32 = arith.constant 1024 : i32
    %41 = arith.muli %arg0, %c1024_i32 : i32
    %42 = vector.broadcast %41 : i32 to vector<1x1024xi32>
    %43 = arith.addi %42, %40 : vector<1x1024xi32>
    %c1600_i32 = arith.constant 1600 : i32
    %44 = vector.broadcast %c1600_i32 : i32 to vector<1x1024xi32>
    %45 = arith.cmpi slt, %43, %44 : vector<1x1024xi32>
    %c30_i32 = arith.constant 30 : i32
    %46 = vector.broadcast %c30_i32 : i32 to vector<1x1024xi32>
    %47 = arith.select %45, %39, %46 : vector<1x1024xi1>, vector<1x1024xi32>
    %cst_14 = arith.constant 0.000000e+00 : f32
    %48 = vector.broadcast %cst_14 : f32 to vector<1x1024xf32>
    %49 = arith.select %45, %31, %48 : vector<1x1024xi1>, vector<1x1024xf32>
    %50 = tpu.iota {dimensions = array<i32: 0>} : vector<30x1024xi32>
    %51 = vector.broadcast %47 : vector<1x1024xi32> to vector<30x1024xi32>
    %52 = arith.cmpi eq, %50, %51 : vector<30x1024xi32>
    %53 = arith.extui %52 : vector<30x1024xi1> to vector<30x1024xi32>
    %54 = arith.sitofp %53 : vector<30x1024xi32> to vector<30x1024xf32>
    %cst_15 = arith.constant 1.000000e+00 : f32
    %55 = vector.broadcast %cst_15 : f32 to vector<1x1024xf32>
    %56 = tpu.concatenate %55, %49 in 0 : vector<1x1024xf32>, vector<1x1024xf32> -> vector<2x1024xf32>
    %c0_16 = arith.constant 0 : index
    %c0_17 = arith.constant 0 : index
    %57 = vector.load %arg6[%c0_16, %c0_17] : memref<30x2xf32, #tpu.memory_space<vmem>>, vector<30x2xf32>
    %cst_18 = arith.constant dense<0.000000e+00> : vector<30x2xf32>
    %58 = tpu.matmul %54, %56, %cst_18 {dimension_numbers = #tpu.dot_dimension_numbers<[1], [1], [0], [0], [0, 0, 1, 0], [], []>} : vector<30x1024xf32>, vector<2x1024xf32>, vector<30x2xf32> -> vector<30x2xf32>
    %59 = arith.addf %57, %58 : vector<30x2xf32>
    %c0_19 = arith.constant 0 : index
    %c0_20 = arith.constant 0 : index
    %60 = vector.load %arg6[%c0_19, %c0_20] : memref<30x2xf32, #tpu.memory_space<vmem>>, vector<30x2xf32>
    tpu.vector_store %arg6[%c0_19, %c0_20], %59 {strides = array<i32>} : memref<30x2xf32, #tpu.memory_space<vmem>>, vector<30x2xf32>,
    %c1_i32 = arith.constant 1 : i32
    %61 = arith.cmpi eq, %arg0, %c1_i32 : i32
    %62 = arith.extui %61 : i1 to i32
    %c0_i32_21 = arith.constant 0 : i32
    %63 = arith.cmpi ne, %62, %c0_i32_21 : i32
    scf.if %63 {
      %c0_22 = arith.constant 0 : index
      %c0_23 = arith.constant 0 : index
      %64 = vector.load %arg6[%c0_22, %c0_23] : memref<30x2xf32, #tpu.memory_space<vmem>>, vector<30x2xf32>
      %65 = vector.extract_strided_slice %64 {offsets = [0, 0], sizes = [30, 1], strides = [1, 1]} : vector<30x2xf32> to vector<30x1xf32>
      %66 = vector.extract_strided_slice %64 {offsets = [0, 1], sizes = [30, 1], strides = [1, 1]} : vector<30x2xf32> to vector<30x1xf32>
      %c0_24 = arith.constant 0 : index
      %c0_25 = arith.constant 0 : index
      %67 = vector.load %arg3[%c0_24, %c0_25] : memref<30x1xf32, #tpu.memory_space<vmem>>, vector<30x1xf32>
      %cst_26 = arith.constant 0.000000e+00 : f32
      %68 = vector.broadcast %cst_26 : f32 to vector<30x1xf32>
      %69 = arith.cmpf ogt, %65, %68 : vector<30x1xf32>
      %70 = arith.extui %69 : vector<30x1xi1> to vector<30x1xi32>
      %71 = arith.sitofp %70 : vector<30x1xi32> to vector<30x1xf32>
      %72 = vector.shape_cast %71 : vector<30x1xf32> to vector<1x30x1xf32>
      %cst_27 = arith.constant dense<0.000000e+00> : vector<1xf32>
      %73 = vector.multi_reduction <add>, %72, %cst_27 [1, 2] : vector<1x30x1xf32> to vector<1xf32>
      %74 = vector.shape_cast %73 : vector<1xf32> to vector<1x1x1xf32>
      %75 = vector.extract %74[0, 0, 0] : f32 from vector<1x1x1xf32>
      %76 = vector.broadcast %75 : f32 to vector<1x1xf32>
      %77 = arith.select %69, %65, %67 : vector<30x1xi1>, vector<30x1xf32>
      %cst_28 = arith.constant 7.500000e-01 : f32
      %78 = vector.broadcast %cst_28 : f32 to vector<30x1xf32>
      %79 = arith.mulf %78, %67 : vector<30x1xf32>
      %cst_29 = arith.constant 2.500000e-01 : f32
      %80 = vector.broadcast %cst_29 : f32 to vector<30x1xf32>
      %81 = arith.mulf %80, %77 : vector<30x1xf32>
      %82 = arith.addf %79, %81 : vector<30x1xf32>
      %83 = arith.divf %66, %82 : vector<30x1xf32>
      %cst_30 = arith.constant 0.000000e+00 : f32
      %84 = vector.broadcast %cst_30 : f32 to vector<30x1xf32>
      %85 = arith.select %69, %83, %84 : vector<30x1xi1>, vector<30x1xf32>
      %86 = vector.shape_cast %85 : vector<30x1xf32> to vector<1x30x1xf32>
      %cst_31 = arith.constant dense<0.000000e+00> : vector<1xf32>
      %87 = vector.multi_reduction <add>, %86, %cst_31 [1, 2] : vector<1x30x1xf32> to vector<1xf32>
      %88 = vector.shape_cast %87 : vector<1xf32> to vector<1x1x1xf32>
      %89 = vector.extract %88[0, 0, 0] : f32 from vector<1x1x1xf32>
      %90 = vector.broadcast %89 : f32 to vector<1x1xf32>
      %91 = arith.divf %90, %76 : vector<1x1xf32>
      %c0_32 = arith.constant 0 : index
      %c0_33 = arith.constant 0 : index
      %92 = vector.load %arg4[%c0_32, %c0_33] : memref<1x1xf32, #tpu.memory_space<vmem>>, vector<1x1xf32>
      tpu.vector_store %arg4[%c0_32, %c0_33], %91 {strides = array<i32>} : memref<1x1xf32, #tpu.memory_space<vmem>>, vector<1x1xf32>,
      %c0_34 = arith.constant 0 : index
      %c0_35 = arith.constant 0 : index
      %93 = vector.load %arg5[%c0_34, %c0_35] : memref<30x1xf32, #tpu.memory_space<vmem>>, vector<30x1xf32>
      tpu.vector_store %arg5[%c0_34, %c0_35], %82 {strides = array<i32>} : memref<30x1xf32, #tpu.memory_space<vmem>>, vector<30x1xf32>,
    } else {
    }
    return
  }
  func.func @transform_0(%arg0: i32) -> (i32, i32) {
    %c0_i32 = arith.constant 0 : i32
    %c0_i32_0 = arith.constant 0 : i32
    return %c0_i32, %arg0 : i32, i32
  }
  func.func @transform_1(%arg0: i32) -> (i32, i32) {
    %c0_i32 = arith.constant 0 : i32
    %c0_i32_0 = arith.constant 0 : i32
    return %c0_i32, %arg0 : i32, i32
  }
  func.func @transform_2(%arg0: i32) -> (i32, i32) {
    %c0_i32 = arith.constant 0 : i32
    %c0_i32_0 = arith.constant 0 : i32
    %c0_i32_1 = arith.constant 0 : i32
    return %c0_i32, %c0_i32_0 : i32, i32
  }
  func.func @transform_3(%arg0: i32) -> (i32, i32) {
    %c0_i32 = arith.constant 0 : i32
    %c0_i32_0 = arith.constant 0 : i32
    %c0_i32_1 = arith.constant 0 : i32
    return %c0_i32, %c0_i32_0 : i32, i32
  }
  func.func @transform_4(%arg0: i32) -> (i32, i32) {
    %c0_i32 = arith.constant 0 : i32
    %c0_i32_0 = arith.constant 0 : i32
    %c0_i32_1 = arith.constant 0 : i32
    return %c0_i32, %c0_i32_0 : i32, i32
  }
}

</mosaic_0001>

<llo_original>
// kernel: tpu_custom_call.1
$region0: #{tpu_custom_call.1}
  #allocation0 [shape = 'u32[]', space=smem, size = 0x4, offset = 0x4, fixed_abs, tag = 'smem constant byte address 0x4 - core index']
  #allocation1 [shape = 'u32[72,128]{1,0:T(1,128)}', space=vmem, size = 0x9000, scoped, tag = 'internal scratch']
  #allocation2 [shape = 'f32[30,2]{1,0:T(8,128)}', space=vmem, size = 0x4000, scoped, tag = 'scratch operand']
  %s0 = inlined_call_operand.vmem [shape: f32[2,1600], index: 0, kind: input, shape index: {}]
  %s1 = inlined_call_operand.hbm [shape: s32[1,1600], index: 1, kind: input, shape index: {}]
  %s2 = inlined_call_operand.vmem [shape: f32[30,1], index: 2, kind: input, shape index: {}]
  %s3 = inlined_call_operand.hbm [shape: f32[1,1], index: 3, kind: output, shape index: {0}]
  %s4 = inlined_call_operand.vmem [shape: f32[30,1], index: 4, kind: output, shape index: {1}]
  %5 = xla_tuple %s3, %s4
  %s6 = sld [smem:[#allocation0]]
  $region65: #{tpu_custom_call.1} parent=0
    _
  %s8 = ssub.s32 1, %s6
  %s9 = scalar_select 0, %s8, %s6
  $region1: #{tpu_custom_call.1} parent=0
    #allocation3 [shape = 'u8[8192]{0}', space=vmem, size = 0x2000, scoped, tag = 'input window, operand 1']
    #allocation4 [shape = 's32[2]{0}', space=sflag, size = 0x8, scoped, tag = 'scoped memory for tpu_custom_call.1']
    #allocation5 [shape = 's32[2]{0}', space=sflag, size = 0x8, scoped, tag = 'scoped memory for tpu_custom_call.1']
    #allocation6 [shape = 'u8[512]{0}', space=vmem, size = 0x400, scoped, tag = 'output window, operand 0, single buffered']
    %10 = vsyncpa [#allocation4], 0
    %s11 = scalar_lea.sflag [#allocation4], 1
    %12 = vsyncpa %s11, 0
    %13 = vsyncpa [#allocation5], 0
    loop: start=0, step=1, limit=4
    $region2: #{tpu_custom_call.1} parent=1 // loop_pre_header
      _
    $region3: #{tpu_custom_call.1} parent=1 // loop_header
      %s15 = sphi 0, %s19
      %p16 = scmp.ge.s32.totalorder %s15, 4
      %s25 = sphi 0, %s27
      %s28 = sphi 0, %s25
      %s29 = sphi 0, %s28
      %s45 = sphi 0, %s29
      %s51 = sphi 0, %s53
      %s54 = sphi 0, %s51
      %s55 = sphi 0, %s54
      %s71 = sphi 0, %s55
      %s75 = sphi 0, %s75
      %s77 = sphi 0, %s75
      %s78 = sphi 0, %s77
      %s92 = sphi 0, %s78
      %s96 = sphi 0, %s96
      %s98 = sphi 0, %s96
      %s99 = sphi 0, %s98
      %s113 = sphi 0, %s99
      %s117 = sphi 0, %s117
      %s119 = sphi 0, %s117
      %s120 = sphi 0, %s119
      %s134 = sphi 0, %s120
    $region4: #{tpu_custom_call.1} parent=1 // loop_header_branch
      %18 = sbr.rel (%p16) target = $region8
    $region5: #{tpu_custom_call.1} parent=1 // loop_body
      %s20 = ssub.s32 %s15, 1
      %s21 = ssub.s32 %s15, 2
      %s22 = sadd.s32 %s15, 1
      %s23 = ssub.s32 %s15, %s22
      %p24 = scmp.eq.s32.totalorder %s23, 0
      %s26 = sadd.s32 %s25, 1
      %s27 = scalar_select %p24, %s25, %s26
      %p30 = pneg %p24
      %p31 = scmp.eq.s32.totalorder %s15, 1
      %p32 = por %p30, %p31
      %p33 = scmp.ne.s32.totalorder %s25, %s28
      %p34 = scmp.eq.s32.totalorder %s15, 0
      %p35 = por %p33, %p34
      %p36 = scmp.ne.s32.totalorder %s25, %s28
      %p37 = scmp.eq.s32.totalorder %s20, 1
      %p38 = por %p36, %p37
      %p39 = scmp.ne.s32.totalorder %s28, %s29
      %p40 = scmp.eq.s32.totalorder %s20, 0
      %p41 = por %p39, %p40
      %p42 = scmp.ne.s32.totalorder %s28, %s29
      %p43 = scmp.eq.s32.totalorder %s21, 1
      %p44 = por %p42, %p43
      %p46 = scmp.ne.s32.totalorder %s29, %s45
      %p47 = scmp.eq.s32.totalorder %s21, 0
      %p48 = por %p46, %p47
      %s49 = ssub.s32 %s15, %s22
      %p50 = scmp.eq.s32.totalorder %s49, 0
      %s52 = sadd.s32 %s51, 1
      %s53 = scalar_select %p50, %s51, %s52
      %p56 = pneg %p50
      %p57 = scmp.eq.s32.totalorder %s15, 1
      %p58 = por %p56, %p57
      %p59 = scmp.ne.s32.totalorder %s51, %s54
      %p60 = scmp.eq.s32.totalorder %s15, 0
      %p61 = por %p59, %p60
      %p62 = scmp.ne.s32.totalorder %s51, %s54
      %p63 = scmp.eq.s32.totalorder %s20, 1
      %p64 = por %p62, %p63
      %p65 = scmp.ne.s32.totalorder %s54, %s55
      %p66 = scmp.eq.s32.totalorder %s20, 0
      %p67 = por %p65, %p66
      %p68 = scmp.ne.s32.totalorder %s54, %s55
      %p69 = scmp.eq.s32.totalorder %s21, 1
      %p70 = por %p68, %p69
      %p72 = scmp.ne.s32.totalorder %s55, %s71
      %p73 = scmp.eq.s32.totalorder %s21, 0
      %p74 = por %p72, %p73
      %s76 = sadd.s32 %s75, 1
      %p79 = scmp.eq.s32.totalorder %s15, 1
      %p80 = scmp.ne.s32.totalorder %s75, %s77
      %p81 = scmp.eq.s32.totalorder %s15, 0
      %p82 = por %p80, %p81
      %p83 = scmp.ne.s32.totalorder %s75, %s77
      %p84 = scmp.eq.s32.totalorder %s20, 1
      %p85 = por %p83, %p84
      %p86 = scmp.ne.s32.totalorder %s77, %s78
      %p87 = scmp.eq.s32.totalorder %s20, 0
      %p88 = por %p86, %p87
      %p89 = scmp.ne.s32.totalorder %s77, %s78
      %p90 = scmp.eq.s32.totalorder %s21, 1
      %p91 = por %p89, %p90
      %p93 = scmp.ne.s32.totalorder %s78, %s92
      %p94 = scmp.eq.s32.totalorder %s21, 0
      %p95 = por %p93, %p94
      %s97 = sadd.s32 %s96, 1
      %p100 = scmp.eq.s32.totalorder %s15, 1
      %p101 = scmp.ne.s32.totalorder %s96, %s98
      %p102 = scmp.eq.s32.totalorder %s15, 0
      %p103 = por %p101, %p102
      %p104 = scmp.ne.s32.totalorder %s96, %s98
      %p105 = scmp.eq.s32.totalorder %s20, 1
      %p106 = por %p104, %p105
      %p107 = scmp.ne.s32.totalorder %s98, %s99
      %p108 = scmp.eq.s32.totalorder %s20, 0
      %p109 = por %p107, %p108
      %p110 = scmp.ne.s32.totalorder %s98, %s99
      %p111 = scmp.eq.s32.totalorder %s21, 1
      %p112 = por %p110, %p111
      %p114 = scmp.ne.s32.totalorder %s99, %s113
      %p115 = scmp.eq.s32.totalorder %s21, 0
      %p116 = por %p114, %p115
      %s118 = sadd.s32 %s117, 1
      %p121 = scmp.eq.s32.totalorder %s15, 1
      %p122 = scmp.ne.s32.totalorder %s117, %s119
      %p123 = scmp.eq.s32.totalorder %s15, 0
      %p124 = por %p122, %p123
      %p125 = scmp.ne.s32.totalorder %s117, %s119
      %p126 = scmp.eq.s32.totalorder %s20, 1
      %p127 = por %p125, %p126
      %p128 = scmp.ne.s32.totalorder %s119, %s120
      %p129 = scmp.eq.s32.totalorder %s20, 0
      %p130 = por %p128, %p129
      %p131 = scmp.ne.s32.totalorder %s119, %s120
      %p132 = scmp.eq.s32.totalorder %s21, 1
      %p133 = por %p131, %p132
      %p135 = scmp.ne.s32.totalorder %s120, %s134
      %p136 = scmp.eq.s32.totalorder %s21, 0
      %p137 = por %p135, %p136
      %p138 = scmp.le.s32.totalorder 1, %s15
      %p139 = scmp.lt.s32.totalorder %s15, 3
      %p140 = pnand %p138, %p139
      %p141 = pneg %p140
      // Predicated region
      $region9: #{tpu_custom_call.1} parent=5 // pred_check
        _
      $region10: #{tpu_custom_call.1} parent=5 // pred_check_branch
        %143 = sbr.rel (%p140) target = $region12
      $region11: #{tpu_custom_call.1} parent=5 // pred_region
        %s144 = ssub.s32 %s15, 1
        // Predicated region
        $region13: #{tpu_custom_call.1} parent=11 // pred_check
          %p145 = pneg %p88
        $region14: #{tpu_custom_call.1} parent=11 // pred_check_branch
          %147 = sbr.rel (%p145) target = $region16
        $region15: #{tpu_custom_call.1} parent=11 // pred_region
          _
        $region16: #{tpu_custom_call.1} parent=11 // pred_fallthru
          _
      $region12: #{tpu_custom_call.1} parent=5 // pred_fallthru
        _
      %p148 = scmp.lt.s32.totalorder %s15, 2
      // Predicated region
      $region17: #{tpu_custom_call.1} parent=5 // pred_check
        %p149 = pneg %p148
      $region18: #{tpu_custom_call.1} parent=5 // pred_check_branch
        %151 = sbr.rel (%p149) target = $region20
      $region19: #{tpu_custom_call.1} parent=5 // pred_region
        // Predicated region
        $region21: #{tpu_custom_call.1} parent=19 // pred_check
          %p152 = pneg %p35
        $region22: #{tpu_custom_call.1} parent=19 // pred_check_branch
          %154 = sbr.rel (%p152) target = $region24
        $region23: #{tpu_custom_call.1} parent=19 // pred_region
          %s155 = smul.u32 8, %s15
          %s156 = ssub.s32 13, %s155
          %p157 = scmp.lt.s32.totalorder %s156, 8
          %s158 = scalar_select %p157, %s156, 8
          %s159 = smul.u32 2, %s158
          %p160 = scmp.lt.s32.totalorder %s155, 12
          %s161 = scalar_select %p160, %s155, 12
          %s162 = smul.addr %s161, 2
          %s163 = scalar_lea.vmem %s0, %s162
          %s164 = smul.u32 8, %s15
          %s165 = ssub.s32 13, %s164
          %p166 = scmp.lt.s32.totalorder %s165, 8
          %s167 = scalar_select %p166, %s165, 8
          %s168 = smul.u32 2, %s167
        $region24: #{tpu_custom_call.1} parent=19 // pred_fallthru
          _
        // Predicated region
        $region25: #{tpu_custom_call.1} parent=19 // pred_check
          %p169 = pneg %p61
        $region26: #{tpu_custom_call.1} parent=19 // pred_check_branch
          %171 = sbr.rel (%p169) target = $region28
        $region27: #{tpu_custom_call.1} parent=19 // pred_region
          %s172 = sand.u32 %s51, 1
          %s173 = scalar_lea.sflag [#allocation4], %s172
          %s174 = sand.u32 %s51, 1
          %s175 = smul.addr %s174, 8
          %s176 = scalar_lea.vmem [#allocation3], %s175
          %s177 = smul.u32 8, %s15
          %s178 = ssub.s32 13, %s177
          %p179 = scmp.lt.s32.totalorder %s178, 8
          %s180 = scalar_select %p179, %s178, 8
          %s181 = ssub.s32 8, %s180
          %s182 = sshll.u32 %s181, 4
          %183 = vsyncadd %s173, %s182
          %p184 = scmp.ne.s32.totalorder 0, %s180
          %s185 = scalar_lea.hbm %s1, %s177
          %s186 = sshll.u32 %s180, 4
          %s187 = sshll.u32 %s185, 4
          %s188 = int_to_ptr.hbm [resolvable:$true] %s187
          %s189 = sshll.u32 %s176, 4
          %s190 = int_to_ptr.vmem [resolvable:$true] %s189
          %192 = dma.hbm_to_vmem [thread:$0]  (%p184), %s188, %s186, %s190, %s173
        $region28: #{tpu_custom_call.1} parent=19 // pred_fallthru
          _
      $region20: #{tpu_custom_call.1} parent=5 // pred_fallthru
        _
      %p193 = scmp.le.s32.totalorder 1, %s15
      %p194 = scmp.lt.s32.totalorder %s15, 3
      %p195 = pnand %p193, %p194
      %p196 = pneg %p195
      // Predicated region
      $region29: #{tpu_custom_call.1} parent=5 // pred_check
        _
      $region30: #{tpu_custom_call.1} parent=5 // pred_check_branch
        %198 = sbr.rel (%p195) target = $region32
      $region31: #{tpu_custom_call.1} parent=5 // pred_region
        %s199 = ssub.s32 %s15, 1
        %s200 = sand.u32 %s54, 1
        %s201 = scalar_lea.sflag [#allocation4], %s200
        %s202 = sand.u32 %s54, 1
        %s203 = smul.addr %s202, 8
        %s204 = scalar_lea.vmem [#allocation3], %s203
        // Predicated region
        $region33: #{tpu_custom_call.1} parent=31 // pred_check
          %p205 = pneg %p67
        $region34: #{tpu_custom_call.1} parent=31 // pred_check_branch
          %207 = sbr.rel (%p205) target = $region36
        $region35: #{tpu_custom_call.1} parent=31 // pred_region
          %209 = dma.done %s201, 128
        $region36: #{tpu_custom_call.1} parent=31 // pred_fallthru
          _
        %s210 = smul.u32 8, %s20
        %s211 = ssub.s32 13, %s210
        %p212 = scmp.lt.s32.totalorder %s211, 8
        %s213 = scalar_select %p212, %s211, 8
        %s214 = smul.u32 2, %s213
        %p215 = scmp.lt.s32.totalorder %s210, 12
        %s216 = scalar_select %p215, %s210, 12
        %s217 = smul.addr %s216, 2
        %s218 = scalar_lea.vmem %s0, %s217
        %p219 = pneg %p41
        %p220 = pneg %p38
        %s221 = sand.u32 %s54, 1
        %s222 = scalar_lea.sflag [#allocation4], %s221
        %s223 = sand.u32 %s54, 1
        %s224 = smul.addr %s223, 8
        %s225 = scalar_lea.vmem [#allocation3], %s224
        %p226 = pneg %p67
        %p227 = pneg %p64
        %p228 = pneg %p88
        %p229 = pneg %p85
        %p230 = pneg %p109
        %p231 = pneg %p106
        %p232 = pneg %p130
        %p233 = pneg %p127
        %s234 = smul.u32 8, %s20
        %s235 = ssub.s32 13, %s234
        %p236 = scmp.lt.s32.totalorder %s235, 8
        %s237 = scalar_select %p236, %s235, 8
        %s238 = smul.u32 2, %s237
        %p239 = scmp.lt.s32.totalorder %s234, 12
        %s240 = scalar_select %p239, %s234, 12
        %s241 = smul.addr %s240, 2
        %s242 = scalar_lea.vmem %s0, %s241
        %s243 = smul.u32 8, %s20
        %s244 = ssub.s32 13, %s243
        %p245 = scmp.lt.s32.totalorder %s244, 8
        %s246 = scalar_select %p245, %s244, 8
        %s247 = smul.u32 2, %s246
        %s248 = smul.u32 8, %s20
        %s249 = ssub.s32 13, %s248
        %p250 = scmp.lt.s32.totalorder %s249, 8
        %s251 = scalar_select %p250, %s249, 8
        %p252 = scmp.eq.s32.totalorder %s20, 0
        // Predicated region
        $region37: #{tpu_custom_call.1} parent=31 // pred_check
          %p253 = pneg %p252
        $region38: #{tpu_custom_call.1} parent=31 // pred_check_branch
          %255 = sbr.rel (%p253) target = $region40
        $region39: #{tpu_custom_call.1} parent=31 // pred_region
          %vm256 = vcmask 15360
          %257 = vst.msk [vmem:[#allocation2] sm:$0xff] %vm256, 0.0
          %258 = vst.msk [vmem:[#allocation2 + $0x8] sm:$0xff] %vm256, 0.0
          %259 = vst.msk [vmem:[#allocation2 + $0x10] sm:$0xff] %vm256, 0.0
          %vm260 = vcmask 13312
          %261 = vst.msk [vmem:[#allocation2 + $0x18] sm:$0x3f] %vm260, 0.0
        $region40: #{tpu_custom_call.1} parent=31 // pred_fallthru
          _
        %v262 = vld [vmem:[%s242] sm:$0xff]
        %v263 = vld [vmem:[%s242 + $0x8] sm:$0xff]
        %v264 = vld [vmem:[%s204] sm:$0xff]
        %v267 = vrot.slane %v262, 7
        %v268 = vrot.slane %v263, 7
        %v271 = vsub.f32 %v262, %v267
        %v272 = vsub.f32 %v263, %v268
        %vm273 = vcmp.gt.s32.totalorder %v264, 0
        %v274 = vsub.f32 0.0, %v271
        %v275 = vsub.f32 0.0, %v272
        %278 = vst [vmem:[#allocation1] sm:$0xff] %v271
        %279 = vst [vmem:[#allocation1 + $0x8] sm:$0xff] %v272
        %s280 = scalar_lea.vmem [#allocation1], 1
        %v281 = vld [vmem:[%s280] ss:$2 sm:$0xff]
        %285 = vst [vmem:[#allocation1] sm:$0xff] %v274
        %286 = vst [vmem:[#allocation1 + $0x8] sm:$0xff] %v275
        %s287 = scalar_lea.vmem [#allocation1], 1
        %v288 = vld [vmem:[%s287] ss:$2 sm:$0xff]
        %v290 = vsel %vm273, %v281, %v288
        %v291 = vand.u32 2147483647, %v290
        %v292 = vsub.f32 0.0, %v291
        %v293 = vmul.f32 %v292, 1.442695
        %v294 = vpow.pop %v293
        %vm295 = vcmp.ge.f32.partialorder %v290, 0.0
        %v296 = vsel %vm295, %v294, 1.0
        %v297 = vadd.f32 %v294, 1.0
        %v298 = vrcp.pop %v297
        %v299 = vmul.f32 %v297, %v298
        %v300 = vsub.f32 1.0, %v299
        %v301 = vmul.f32 %v298, %v300
        %v302 = vadd.f32 %v298, %v301
        %vm303 = vweird.f32 %v297
        %vm304 = vweird.f32 %v298
        %vm305 = vmor %vm303, %vm304
        %v306 = vsel %vm305, %v298, %v302
        %v307 = vand.u32 2147483647, %v297
        %vm308 = vcmp.eq.f32.partialorder %v307, 8.507059e+37
        %v309 = vand.u32 %v297, 2147483648
        %v310 = vor.u32 1.1754944e-38, %v309
        %v311 = vsel %vm308, %v310, %v306
        %v312 = vmul.f32 %v296, %v311
        %v313 = vsub.f32 0.0, %v290
        %v314 = vmax.f32 %v313, 0.0
        %v315 = vlog2.pop %v297
        %v316 = vmul.f32 %v315, 0.6931472
        %v317 = vadd.f32 %v314, %v316
        %v318 = vmul.f32 %v312, 30.0
        %v319 = vfloor.f32 %v318
        %v320 = vcvt.f32.s32.to.zero.pseudo %v319
        %vm321 = vcmp.gt.s32.totalorder %v320, 0
        %v322 = vsel %vm321, %v320, 0
        %vm323 = vcmp.lt.s32.totalorder %v322, 29
        %v324 = vsel %vm323, %v322, 29
        %v325 = vlaneseq
        %v326 = vand.u32 %v325, 127
        %v327 = vadd.s32 %v326, 128
        %v328 = vadd.s32 %v326, 256
        %v329 = vadd.s32 %v326, 384
        %v330 = vadd.s32 %v326, 512
        %v331 = vadd.s32 %v326, 640
        %v332 = vadd.s32 %v326, 768
        %v333 = vadd.s32 %v326, 896
        %s334 = smul.u32 %s20, 1024
        %v335 = vstv %s334
        %v336 = vadd.s32 %v335, %v326
        %v337 = vadd.s32 %v335, %v327
        %v338 = vadd.s32 %v335, %v328
        %v339 = vadd.s32 %v335, %v329
        %v340 = vadd.s32 %v335, %v330
        %v341 = vadd.s32 %v335, %v331
        %v342 = vadd.s32 %v335, %v332
        %v343 = vadd.s32 %v335, %v333
        %vm344 = vcmp.lt.s32.totalorder %v336, 1600
        %vm345 = vcmp.lt.s32.totalorder %v337, 1600
        %vm346 = vcmp.lt.s32.totalorder %v338, 1600
        %vm347 = vcmp.lt.s32.totalorder %v339, 1600
        %vm348 = vcmp.lt.s32.totalorder %v340, 1600
        %vm349 = vcmp.lt.s32.totalorder %v341, 1600
        %vm350 = vcmp.lt.s32.totalorder %v342, 1600
        %vm351 = vcmp.lt.s32.totalorder %v343, 1600
        %v352 = vperm.slane %v324, 0
        %v353 = vperm.slane %v324, 1
        %v354 = vperm.slane %v324, 2
        %v355 = vperm.slane %v324, 3
        %v356 = vperm.slane %v324, 4
        %v357 = vperm.slane %v324, 5
        %v358 = vperm.slane %v324, 6
        %v359 = vperm.slane %v324, 7
        %v360 = vsel %vm344, %v352, 30
        %v361 = vsel %vm345, %v353, 30
        %v362 = vsel %vm346, %v354, 30
        %v363 = vsel %vm347, %v355, 30
        %v364 = vsel %vm348, %v356, 30
        %v365 = vsel %vm349, %v357, 30
        %v366 = vsel %vm350, %v358, 30
        %v367 = vsel %vm351, %v359, 30
        %v369 = vperm.slane %v317, 0
        %v370 = vperm.slane %v317, 1
        %v371 = vperm.slane %v317, 2
        %v372 = vperm.slane %v317, 3
        %v373 = vperm.slane %v317, 4
        %v374 = vperm.slane %v317, 5
        %v375 = vperm.slane %v317, 6
        %v376 = vperm.slane %v317, 7
        %v385 = vsel %vm344, %v369, 0.0
        %v386 = vsel %vm345, %v370, 0.0
        %v387 = vsel %vm346, %v371, 0.0
        %v388 = vsel %vm347, %v372, 0.0
        %v389 = vsel %vm348, %v373, 0.0
        %v390 = vsel %vm349, %v374, 0.0
        %v391 = vsel %vm350, %v375, 0.0
        %v392 = vsel %vm351, %v376, 0.0
        %v393 = vlaneseq
        %v394 = vshrl.u32 %v393, 7
        %v395 = vadd.s32 %v394, 8
        %v396 = vadd.s32 %v394, 16
        %v397 = vadd.s32 %v394, 24
        %v398 = vperm.slane %v360, 0
        %v399 = vperm.slane %v361, 0
        %v400 = vperm.slane %v362, 0
        %v401 = vperm.slane %v363, 0
        %v402 = vperm.slane %v364, 0
        %v403 = vperm.slane %v365, 0
        %v404 = vperm.slane %v366, 0
        %v405 = vperm.slane %v367, 0
        %vm406 = vcmp.eq.s32.totalorder %v394, %v398
        %vm407 = vcmp.eq.s32.totalorder %v394, %v399
        %vm408 = vcmp.eq.s32.totalorder %v394, %v400
        %vm409 = vcmp.eq.s32.totalorder %v394, %v401
        %vm410 = vcmp.eq.s32.totalorder %v394, %v402
        %vm411 = vcmp.eq.s32.totalorder %v394, %v403
        %vm412 = vcmp.eq.s32.totalorder %v394, %v404
        %vm413 = vcmp.eq.s32.totalorder %v394, %v405
        %vm414 = vcmp.eq.s32.totalorder %v395, %v398
        %vm415 = vcmp.eq.s32.totalorder %v395, %v399
        %vm416 = vcmp.eq.s32.totalorder %v395, %v400
        %vm417 = vcmp.eq.s32.totalorder %v395, %v401
        %vm418 = vcmp.eq.s32.totalorder %v395, %v402
        %vm419 = vcmp.eq.s32.totalorder %v395, %v403
        %vm420 = vcmp.eq.s32.totalorder %v395, %v404
        %vm421 = vcmp.eq.s32.totalorder %v395, %v405
        %vm422 = vcmp.eq.s32.totalorder %v396, %v398
        %vm423 = vcmp.eq.s32.totalorder %v396, %v399
        %vm424 = vcmp.eq.s32.totalorder %v396, %v400
        %vm425 = vcmp.eq.s32.totalorder %v396, %v401
        %vm426 = vcmp.eq.s32.totalorder %v396, %v402
        %vm427 = vcmp.eq.s32.totalorder %v396, %v403
        %vm428 = vcmp.eq.s32.totalorder %v396, %v404
        %vm429 = vcmp.eq.s32.totalorder %v396, %v405
        %vm430 = vcmp.eq.s32.totalorder %v397, %v398
        %vm431 = vcmp.eq.s32.totalorder %v397, %v399
        %vm432 = vcmp.eq.s32.totalorder %v397, %v400
        %vm433 = vcmp.eq.s32.totalorder %v397, %v401
        %vm434 = vcmp.eq.s32.totalorder %v397, %v402
        %vm435 = vcmp.eq.s32.totalorder %v397, %v403
        %vm436 = vcmp.eq.s32.totalorder %v397, %v404
        %vm437 = vcmp.eq.s32.totalorder %v397, %v405
        %v438 = vsel %vm406, 1, 0
        %v439 = vsel %vm407, 1, 0
        %v440 = vsel %vm408, 1, 0
        %v441 = vsel %vm409, 1, 0
        %v442 = vsel %vm410, 1, 0
        %v443 = vsel %vm411, 1, 0
        %v444 = vsel %vm412, 1, 0
        %v445 = vsel %vm413, 1, 0
        %v446 = vsel %vm414, 1, 0
        %v447 = vsel %vm415, 1, 0
        %v448 = vsel %vm416, 1, 0
        %v449 = vsel %vm417, 1, 0
        %v450 = vsel %vm418, 1, 0
        %v451 = vsel %vm419, 1, 0
        %v452 = vsel %vm420, 1, 0
        %v453 = vsel %vm421, 1, 0
        %v454 = vsel %vm422, 1, 0
        %v455 = vsel %vm423, 1, 0
        %v456 = vsel %vm424, 1, 0
        %v457 = vsel %vm425, 1, 0
        %v458 = vsel %vm426, 1, 0
        %v459 = vsel %vm427, 1, 0
        %v460 = vsel %vm428, 1, 0
        %v461 = vsel %vm429, 1, 0
        %v462 = vsel %vm430, 1, 0
        %v463 = vsel %vm431, 1, 0
        %v464 = vsel %vm432, 1, 0
        %v465 = vsel %vm433, 1, 0
        %v466 = vsel %vm434, 1, 0
        %v467 = vsel %vm435, 1, 0
        %v468 = vsel %vm436, 1, 0
        %v469 = vsel %vm437, 1, 0
        %v470 = vcvt.s32.f32 %v438
        %v471 = vcvt.s32.f32 %v439
        %v472 = vcvt.s32.f32 %v440
        %v473 = vcvt.s32.f32 %v441
        %v474 = vcvt.s32.f32 %v442
        %v475 = vcvt.s32.f32 %v443
        %v476 = vcvt.s32.f32 %v444
        %v477 = vcvt.s32.f32 %v445
        %v478 = vcvt.s32.f32 %v446
        %v479 = vcvt.s32.f32 %v447
        %v480 = vcvt.s32.f32 %v448
        %v481 = vcvt.s32.f32 %v449
        %v482 = vcvt.s32.f32 %v450
        %v483 = vcvt.s32.f32 %v451
        %v484 = vcvt.s32.f32 %v452
        %v485 = vcvt.s32.f32 %v453
        %v486 = vcvt.s32.f32 %v454
        %v487 = vcvt.s32.f32 %v455
        %v488 = vcvt.s32.f32 %v456
        %v489 = vcvt.s32.f32 %v457
        %v490 = vcvt.s32.f32 %v458
        %v491 = vcvt.s32.f32 %v459
        %v492 = vcvt.s32.f32 %v460
        %v493 = vcvt.s32.f32 %v461
        %v494 = vcvt.s32.f32 %v462
        %v495 = vcvt.s32.f32 %v463
        %v496 = vcvt.s32.f32 %v464
        %v497 = vcvt.s32.f32 %v465
        %v498 = vcvt.s32.f32 %v466
        %v499 = vcvt.s32.f32 %v467
        %v500 = vcvt.s32.f32 %v468
        %v501 = vcvt.s32.f32 %v469
        %v510 = vrot.slane %v385, 7
        %v511 = vrot.slane %v386, 7
        %v512 = vrot.slane %v387, 7
        %v513 = vrot.slane %v388, 7
        %v514 = vrot.slane %v389, 7
        %v515 = vrot.slane %v390, 7
        %v516 = vrot.slane %v391, 7
        %v517 = vrot.slane %v392, 7
        %vm526 = vcmask 1040384
        %v527 = vsel %vm526, 1.0, %v510
        %v528 = vsel %vm526, 1.0, %v511
        %v529 = vsel %vm526, 1.0, %v512
        %v530 = vsel %vm526, 1.0, %v513
        %v531 = vsel %vm526, 1.0, %v514
        %v532 = vsel %vm526, 1.0, %v515
        %v533 = vsel %vm526, 1.0, %v516
        %v534 = vsel %vm526, 1.0, %v517
        %v535 = vld [vmem:[#allocation2] sm:$0xff]
        %v536 = vld [vmem:[#allocation2 + $0x8] sm:$0xff]
        %v537 = vld [vmem:[#allocation2 + $0x10] sm:$0xff]
        %v538 = vld [vmem:[#allocation2 + $0x18] sm:$0x3f]
        %539 = vmatpush.xpose.msra.mxu0 0.0
        %540 = vmatpush.xpose.msra.mxu0 0.0
        %541 = vmatpush.xpose.msra.mxu0 0.0
        %542 = vmatpush.xpose.msra.mxu0 0.0
        %543 = vmatpush.xpose.msra.mxu0 0.0
        %544 = vmatpush.xpose.msra.mxu0 0.0
        %545 = vmatpush.xpose.msra.mxu0 0.0
        %546 = vmatpush.xpose.msra.mxu0 0.0
        %547 = vmatpush.xpose.msra.mxu0 0.0
        %548 = vmatpush.xpose.msra.mxu0 0.0
        %549 = vmatpush.xpose.msra.mxu0 0.0
        %550 = vmatpush.xpose.msra.mxu0 0.0
        %551 = vmatpush.xpose.msra.mxu0 0.0
        %552 = vmatpush.xpose.msra.mxu0 0.0
        %553 = vmatpush.xpose.msra.mxu0 0.0
        %554 = vmatpush.xpose.msra.mxu0 %v527
        %555 = vmatmul.f32.gmra.mxu0 %v470
        %v556 = vpop.f32.mrf.mxu0
        %v557 = vadd.f32 0.0, %v556
        %558 = vmatmul.f32.gmra.mxu0 %v478
        %v559 = vpop.f32.mrf.mxu0
        %v560 = vadd.f32 0.0, %v559
        %561 = vmatmul.f32.gmra.mxu0 %v486
        %v562 = vpop.f32.mrf.mxu0
        %v563 = vadd.f32 0.0, %v562
        %564 = vmatmul.f32.gmra.mxu0 %v494
        %v565 = vpop.f32.mrf.mxu0
        %v566 = vadd.f32 0.0, %v565
        %567 = vdwg.mxu0
        %568 = vmatpush.xpose.msra.mxu0 0.0
        %569 = vmatpush.xpose.msra.mxu0 0.0
        %570 = vmatpush.xpose.msra.mxu0 0.0
        %571 = vmatpush.xpose.msra.mxu0 0.0
        %572 = vmatpush.xpose.msra.mxu0 0.0
        %573 = vmatpush.xpose.msra.mxu0 0.0
        %574 = vmatpush.xpose.msra.mxu0 0.0
        %575 = vmatpush.xpose.msra.mxu0 0.0
        %576 = vmatpush.xpose.msra.mxu0 0.0
        %577 = vmatpush.xpose.msra.mxu0 0.0
        %578 = vmatpush.xpose.msra.mxu0 0.0
        %579 = vmatpush.xpose.msra.mxu0 0.0
        %580 = vmatpush.xpose.msra.mxu0 0.0
        %581 = vmatpush.xpose.msra.mxu0 0.0
        %582 = vmatpush.xpose.msra.mxu0 0.0
        %583 = vmatpush.xpose.msra.mxu0 %v528
        %584 = vmatmul.f32.gmra.mxu0 %v471
        %v585 = vpop.f32.mrf.mxu0
        %v586 = vadd.f32 %v557, %v585
        %587 = vmatmul.f32.gmra.mxu0 %v479
        %v588 = vpop.f32.mrf.mxu0
        %v589 = vadd.f32 %v560, %v588
        %590 = vmatmul.f32.gmra.mxu0 %v487
        %v591 = vpop.f32.mrf.mxu0
        %v592 = vadd.f32 %v563, %v591
        %593 = vmatmul.f32.gmra.mxu0 %v495
        %v594 = vpop.f32.mrf.mxu0
        %v595 = vadd.f32 %v566, %v594
        %596 = vdwg.mxu0
        %597 = vmatpush.xpose.msra.mxu0 0.0
        %598 = vmatpush.xpose.msra.mxu0 0.0
        %599 = vmatpush.xpose.msra.mxu0 0.0
        %600 = vmatpush.xpose.msra.mxu0 0.0
        %601 = vmatpush.xpose.msra.mxu0 0.0
        %602 = vmatpush.xpose.msra.mxu0 0.0
        %603 = vmatpush.xpose.msra.mxu0 0.0
        %604 = vmatpush.xpose.msra.mxu0 0.0
        %605 = vmatpush.xpose.msra.mxu0 0.0
        %606 = vmatpush.xpose.msra.mxu0 0.0
        %607 = vmatpush.xpose.msra.mxu0 0.0
        %608 = vmatpush.xpose.msra.mxu0 0.0
        %609 = vmatpush.xpose.msra.mxu0 0.0
        %610 = vmatpush.xpose.msra.mxu0 0.0
        %611 = vmatpush.xpose.msra.mxu0 0.0
        %612 = vmatpush.xpose.msra.mxu0 %v529
        %613 = vmatmul.f32.gmra.mxu0 %v472
        %v614 = vpop.f32.mrf.mxu0
        %v615 = vadd.f32 %v586, %v614
        %616 = vmatmul.f32.gmra.mxu0 %v480
        %v617 = vpop.f32.mrf.mxu0
        %v618 = vadd.f32 %v589, %v617
        %619 = vmatmul.f32.gmra.mxu0 %v488
        %v620 = vpop.f32.mrf.mxu0
        %v621 = vadd.f32 %v592, %v620
        %622 = vmatmul.f32.gmra.mxu0 %v496
        %v623 = vpop.f32.mrf.mxu0
        %v624 = vadd.f32 %v595, %v623
        %625 = vdwg.mxu0
        %626 = vmatpush.xpose.msra.mxu0 0.0
        %627 = vmatpush.xpose.msra.mxu0 0.0
        %628 = vmatpush.xpose.msra.mxu0 0.0
        %629 = vmatpush.xpose.msra.mxu0 0.0
        %630 = vmatpush.xpose.msra.mxu0 0.0
        %631 = vmatpush.xpose.msra.mxu0 0.0
        %632 = vmatpush.xpose.msra.mxu0 0.0
        %633 = vmatpush.xpose.msra.mxu0 0.0
        %634 = vmatpush.xpose.msra.mxu0 0.0
        %635 = vmatpush.xpose.msra.mxu0 0.0
        %636 = vmatpush.xpose.msra.mxu0 0.0
        %637 = vmatpush.xpose.msra.mxu0 0.0
        %638 = vmatpush.xpose.msra.mxu0 0.0
        %639 = vmatpush.xpose.msra.mxu0 0.0
        %640 = vmatpush.xpose.msra.mxu0 0.0
        %641 = vmatpush.xpose.msra.mxu0 %v530
        %642 = vmatmul.f32.gmra.mxu0 %v473
        %v643 = vpop.f32.mrf.mxu0
        %v644 = vadd.f32 %v615, %v643
        %645 = vmatmul.f32.gmra.mxu0 %v481
        %v646 = vpop.f32.mrf.mxu0
        %v647 = vadd.f32 %v618, %v646
        %648 = vmatmul.f32.gmra.mxu0 %v489
        %v649 = vpop.f32.mrf.mxu0
        %v650 = vadd.f32 %v621, %v649
        %651 = vmatmul.f32.gmra.mxu0 %v497
        %v652 = vpop.f32.mrf.mxu0
        %v653 = vadd.f32 %v624, %v652
        %654 = vdwg.mxu0
        %655 = vmatpush.xpose.msra.mxu0 0.0
        %656 = vmatpush.xpose.msra.mxu0 0.0
        %657 = vmatpush.xpose.msra.mxu0 0.0
        %658 = vmatpush.xpose.msra.mxu0 0.0
        %659 = vmatpush.xpose.msra.mxu0 0.0
        %660 = vmatpush.xpose.msra.mxu0 0.0
        %661 = vmatpush.xpose.msra.mxu0 0.0
        %662 = vmatpush.xpose.msra.mxu0 0.0
        %663 = vmatpush.xpose.msra.mxu0 0.0
        %664 = vmatpush.xpose.msra.mxu0 0.0
        %665 = vmatpush.xpose.msra.mxu0 0.0
        %666 = vmatpush.xpose.msra.mxu0 0.0
        %667 = vmatpush.xpose.msra.mxu0 0.0
        %668 = vmatpush.xpose.msra.mxu0 0.0
        %669 = vmatpush.xpose.msra.mxu0 0.0
        %670 = vmatpush.xpose.msra.mxu0 %v531
        %671 = vmatmul.f32.gmra.mxu0 %v474
        %v672 = vpop.f32.mrf.mxu0
        %v673 = vadd.f32 %v644, %v672
        %674 = vmatmul.f32.gmra.mxu0 %v482
        %v675 = vpop.f32.mrf.mxu0
        %v676 = vadd.f32 %v647, %v675
        %677 = vmatmul.f32.gmra.mxu0 %v490
        %v678 = vpop.f32.mrf.mxu0
        %v679 = vadd.f32 %v650, %v678
        %680 = vmatmul.f32.gmra.mxu0 %v498
        %v681 = vpop.f32.mrf.mxu0
        %v682 = vadd.f32 %v653, %v681
        %683 = vdwg.mxu0
        %684 = vmatpush.xpose.msra.mxu0 0.0
        %685 = vmatpush.xpose.msra.mxu0 0.0
        %686 = vmatpush.xpose.msra.mxu0 0.0
        %687 = vmatpush.xpose.msra.mxu0 0.0
        %688 = vmatpush.xpose.msra.mxu0 0.0
        %689 = vmatpush.xpose.msra.mxu0 0.0
        %690 = vmatpush.xpose.msra.mxu0 0.0
        %691 = vmatpush.xpose.msra.mxu0 0.0
        %692 = vmatpush.xpose.msra.mxu0 0.0
        %693 = vmatpush.xpose.msra.mxu0 0.0
        %694 = vmatpush.xpose.msra.mxu0 0.0
        %695 = vmatpush.xpose.msra.mxu0 0.0
        %696 = vmatpush.xpose.msra.mxu0 0.0
        %697 = vmatpush.xpose.msra.mxu0 0.0
        %698 = vmatpush.xpose.msra.mxu0 0.0
        %699 = vmatpush.xpose.msra.mxu0 %v532
        %700 = vmatmul.f32.gmra.mxu0 %v475
        %v701 = vpop.f32.mrf.mxu0
        %v702 = vadd.f32 %v673, %v701
        %703 = vmatmul.f32.gmra.mxu0 %v483
        %v704 = vpop.f32.mrf.mxu0
        %v705 = vadd.f32 %v676, %v704
        %706 = vmatmul.f32.gmra.mxu0 %v491
        %v707 = vpop.f32.mrf.mxu0
        %v708 = vadd.f32 %v679, %v707
        %709 = vmatmul.f32.gmra.mxu0 %v499
        %v710 = vpop.f32.mrf.mxu0
        %v711 = vadd.f32 %v682, %v710
        %712 = vdwg.mxu0
        %713 = vmatpush.xpose.msra.mxu0 0.0
        %714 = vmatpush.xpose.msra.mxu0 0.0
        %715 = vmatpush.xpose.msra.mxu0 0.0
        %716 = vmatpush.xpose.msra.mxu0 0.0
        %717 = vmatpush.xpose.msra.mxu0 0.0
        %718 = vmatpush.xpose.msra.mxu0 0.0
        %719 = vmatpush.xpose.msra.mxu0 0.0
        %720 = vmatpush.xpose.msra.mxu0 0.0
        %721 = vmatpush.xpose.msra.mxu0 0.0
        %722 = vmatpush.xpose.msra.mxu0 0.0
        %723 = vmatpush.xpose.msra.mxu0 0.0
        %724 = vmatpush.xpose.msra.mxu0 0.0
        %725 = vmatpush.xpose.msra.mxu0 0.0
        %726 = vmatpush.xpose.msra.mxu0 0.0
        %727 = vmatpush.xpose.msra.mxu0 0.0
        %728 = vmatpush.xpose.msra.mxu0 %v533
        %729 = vmatmul.f32.gmra.mxu0 %v476
        %v730 = vpop.f32.mrf.mxu0
        %v731 = vadd.f32 %v702, %v730
        %732 = vmatmul.f32.gmra.mxu0 %v484
        %v733 = vpop.f32.mrf.mxu0
        %v734 = vadd.f32 %v705, %v733
        %735 = vmatmul.f32.gmra.mxu0 %v492
        %v736 = vpop.f32.mrf.mxu0
        %v737 = vadd.f32 %v708, %v736
        %738 = vmatmul.f32.gmra.mxu0 %v500
        %v739 = vpop.f32.mrf.mxu0
        %v740 = vadd.f32 %v711, %v739
        %741 = vdwg.mxu0
        %742 = vmatpush.xpose.msra.mxu0 0.0
        %743 = vmatpush.xpose.msra.mxu0 0.0
        %744 = vmatpush.xpose.msra.mxu0 0.0
        %745 = vmatpush.xpose.msra.mxu0 0.0
        %746 = vmatpush.xpose.msra.mxu0 0.0
        %747 = vmatpush.xpose.msra.mxu0 0.0
        %748 = vmatpush.xpose.msra.mxu0 0.0
        %749 = vmatpush.xpose.msra.mxu0 0.0
        %750 = vmatpush.xpose.msra.mxu0 0.0
        %751 = vmatpush.xpose.msra.mxu0 0.0
        %752 = vmatpush.xpose.msra.mxu0 0.0
        %753 = vmatpush.xpose.msra.mxu0 0.0
        %754 = vmatpush.xpose.msra.mxu0 0.0
        %755 = vmatpush.xpose.msra.mxu0 0.0
        %756 = vmatpush.xpose.msra.mxu0 0.0
        %757 = vmatpush.xpose.msra.mxu0 %v534
        %758 = vmatmul.f32.gmra.mxu0 %v477
        %v759 = vpop.f32.mrf.mxu0
        %v760 = vadd.f32 %v731, %v759
        %761 = vmatmul.f32.gmra.mxu0 %v485
        %v762 = vpop.f32.mrf.mxu0
        %v763 = vadd.f32 %v734, %v762
        %764 = vmatmul.f32.gmra.mxu0 %v493
        %v765 = vpop.f32.mrf.mxu0
        %v766 = vadd.f32 %v737, %v765
        %767 = vmatmul.f32.gmra.mxu0 %v501
        %v768 = vpop.f32.mrf.mxu0
        %v769 = vadd.f32 %v740, %v768
        %770 = vdwg.mxu0
        %v771 = vadd.f32 %v535, %v760
        %v772 = vadd.f32 %v536, %v763
        %v773 = vadd.f32 %v537, %v766
        %v774 = vadd.f32 %v538, %v769
        %vm775 = vcmask 15360
        %776 = vst.msk [vmem:[#allocation2] sm:$0xff] %vm775, %v771
        %777 = vst.msk [vmem:[#allocation2 + $0x8] sm:$0xff] %vm775, %v772
        %778 = vst.msk [vmem:[#allocation2 + $0x10] sm:$0xff] %vm775, %v773
        %vm779 = vcmask 13312
        %780 = vst.msk [vmem:[#allocation2 + $0x18] sm:$0x3f] %vm779, %v774
        %p781 = scmp.eq.s32.totalorder %s20, 1
        // Predicated region
        $region41: #{tpu_custom_call.1} parent=31 // pred_check
          %p782 = pneg %p781
        $region42: #{tpu_custom_call.1} parent=31 // pred_check_branch
          %784 = sbr.rel (%p782) target = $region44
        $region43: #{tpu_custom_call.1} parent=31 // pred_region
          %v785 = vld [vmem:[#allocation2] sm:$0xff]
          %v786 = vld [vmem:[#allocation2 + $0x8] sm:$0xff]
          %v787 = vld [vmem:[#allocation2 + $0x10] sm:$0xff]
          %v788 = vld [vmem:[#allocation2 + $0x18] sm:$0x3f]
          %v789 = vld [vmem:[%s2] sm:$0xff]
          %v790 = vld [vmem:[%s2 + $0x8] sm:$0xff]
          %v791 = vld [vmem:[%s2 + $0x10] sm:$0xff]
          %v792 = vld [vmem:[%s2 + $0x18] sm:$0x3f]
          %vm793 = vcmp.gt.f32.partialorder %v785, 0.0
          %vm794 = vcmp.gt.f32.partialorder %v786, 0.0
          %vm795 = vcmp.gt.f32.partialorder %v787, 0.0
          %vm796 = vcmp.gt.f32.partialorder %v788, 0.0
          %v797 = vsel %vm793, 1, 0
          %v798 = vsel %vm794, 1, 0
          %v799 = vsel %vm795, 1, 0
          %v800 = vsel %vm796, 1, 0
          %v801 = vcvt.s32.f32 %v797
          %v802 = vcvt.s32.f32 %v798
          %v803 = vcvt.s32.f32 %v799
          %v804 = vcvt.s32.f32 %v800
          %vm805 = vcmask 7168
          %v806 = vsel %vm805, %v801, 0.0
          %v807 = vsel %vm805, %v802, 0.0
          %v808 = vadd.f32 %v806, %v807
          %v809 = vsel %vm805, %v803, 0.0
          %v810 = vadd.f32 %v808, %v809
          %vm811 = vcmask 5120
          %v812 = vsel %vm811, %v804, 0.0
          %v813 = vadd.f32 %v810, %v812
          %814 = vadd.xlane.f32.xlu0 %v813
          %v815 = vpop.xlane.xlu0 %814
          %v816 = vrot.slane %v815, 4
          %v817 = vadd.f32 %v815, %v816
          %v818 = vrot.slane %v817, 2
          %v819 = vadd.f32 %v817, %v818
          %v820 = vrot.slane %v819, 1
          %v821 = vadd.f32 %v819, %v820
          %s822 = vtos %v821
          %v823 = vstv %s822
          %v824 = vsel %vm793, %v785, %v789
          %v825 = vsel %vm794, %v786, %v790
          %v826 = vsel %vm795, %v787, %v791
          %v827 = vsel %vm796, %v788, %v792
          %v828 = vmul.f32 %v789, 0.75
          %v829 = vmul.f32 %v790, 0.75
          %v830 = vmul.f32 %v791, 0.75
          %v831 = vmul.f32 %v792, 0.75
          %v832 = vmul.f32 %v824, 0.25
          %v833 = vmul.f32 %v825, 0.25
          %v834 = vmul.f32 %v826, 0.25
          %v835 = vmul.f32 %v827, 0.25
          %v836 = vadd.f32 %v828, %v832
          %v837 = vadd.f32 %v829, %v833
          %v838 = vadd.f32 %v830, %v834
          %v839 = vadd.f32 %v831, %v835
          %844 = vrot.lane.b32.xlu0 %v836, 1
          %v845 = vpop.permute.xlu0 %844
          %846 = vrot.lane.b32.xlu0 %v837, 1
          %v847 = vpop.permute.xlu0 %846
          %848 = vrot.lane.b32.xlu0 %v838, 1
          %v849 = vpop.permute.xlu0 %848
          %850 = vrot.lane.b32.xlu0 %v839, 1
          %v851 = vpop.permute.xlu0 %850
          %v856 = vrcp.pop %v845
          %v857 = vmul.f32 %v845, %v856
          %v858 = vsub.f32 1.0, %v857
          %v859 = vmul.f32 %v856, %v858
          %v860 = vadd.f32 %v856, %v859
          %vm861 = vweird.f32 %v845
          %vm862 = vweird.f32 %v856
          %vm863 = vmor %vm861, %vm862
          %v864 = vsel %vm863, %v856, %v860
          %v865 = vand.u32 2147483647, %v845
          %vm866 = vcmp.eq.f32.partialorder %v865, 8.507059e+37
          %v867 = vand.u32 %v845, 2147483648
          %v868 = vor.u32 1.1754944e-38, %v867
          %v869 = vsel %vm866, %v868, %v864
          %v870 = vmul.f32 %v785, %v869
          %v871 = vrcp.pop %v847
          %v872 = vmul.f32 %v847, %v871
          %v873 = vsub.f32 1.0, %v872
          %v874 = vmul.f32 %v871, %v873
          %v875 = vadd.f32 %v871, %v874
          %vm876 = vweird.f32 %v847
          %vm877 = vweird.f32 %v871
          %vm878 = vmor %vm876, %vm877
          %v879 = vsel %vm878, %v871, %v875
          %v880 = vand.u32 2147483647, %v847
          %vm881 = vcmp.eq.f32.partialorder %v880, 8.507059e+37
          %v882 = vand.u32 %v847, 2147483648
          %v883 = vor.u32 1.1754944e-38, %v882
          %v884 = vsel %vm881, %v883, %v879
          %v885 = vmul.f32 %v786, %v884
          %v886 = vrcp.pop %v849
          %v887 = vmul.f32 %v849, %v886
          %v888 = vsub.f32 1.0, %v887
          %v889 = vmul.f32 %v886, %v888
          %v890 = vadd.f32 %v886, %v889
          %vm891 = vweird.f32 %v849
          %vm892 = vweird.f32 %v886
          %vm893 = vmor %vm891, %vm892
          %v894 = vsel %vm893, %v886, %v890
          %v895 = vand.u32 2147483647, %v849
          %vm896 = vcmp.eq.f32.partialorder %v895, 8.507059e+37
          %v897 = vand.u32 %v849, 2147483648
          %v898 = vor.u32 1.1754944e-38, %v897
          %v899 = vsel %vm896, %v898, %v894
          %v900 = vmul.f32 %v787, %v899
          %v901 = vrcp.pop %v851
          %v902 = vmul.f32 %v851, %v901
          %v903 = vsub.f32 1.0, %v902
          %v904 = vmul.f32 %v901, %v903
          %v905 = vadd.f32 %v901, %v904
          %vm906 = vweird.f32 %v851
          %vm907 = vweird.f32 %v901
          %vm908 = vmor %vm906, %vm907
          %v909 = vsel %vm908, %v901, %v905
          %v910 = vand.u32 2147483647, %v851
          %vm911 = vcmp.eq.f32.partialorder %v910, 8.507059e+37
          %v912 = vand.u32 %v851, 2147483648
          %v913 = vor.u32 1.1754944e-38, %v912
          %v914 = vsel %vm911, %v913, %v909
          %v915 = vmul.f32 %v788, %v914
          %920 = vrot.lane.b32.xlu0 %v870, 127
          %v921 = vpop.permute.xlu0 %920
          %922 = vrot.lane.b32.xlu0 %v885, 127
          %v923 = vpop.permute.xlu0 %922
          %924 = vrot.lane.b32.xlu0 %v900, 127
          %v925 = vpop.permute.xlu0 %924
          %926 = vrot.lane.b32.xlu0 %v915, 127
          %v927 = vpop.permute.xlu0 %926
          %v932 = vsel %vm793, %v921, 0.0
          %v933 = vsel %vm794, %v923, 0.0
          %v934 = vsel %vm795, %v925, 0.0
          %v935 = vsel %vm796, %v927, 0.0
          %v936 = vsel %vm805, %v932, 0.0
          %v937 = vsel %vm805, %v933, 0.0
          %v938 = vadd.f32 %v936, %v937
          %v939 = vsel %vm805, %v934, 0.0
          %v940 = vadd.f32 %v938, %v939
          %v941 = vsel %vm811, %v935, 0.0
          %v942 = vadd.f32 %v940, %v941
          %943 = vadd.xlane.f32.xlu0 %v942
          %v944 = vpop.xlane.xlu0 %943
          %v945 = vrot.slane %v944, 4
          %v946 = vadd.f32 %v944, %v945
          %v947 = vrot.slane %v946, 2
          %v948 = vadd.f32 %v946, %v947
          %v949 = vrot.slane %v948, 1
          %v950 = vadd.f32 %v948, %v949
          %s951 = vtos %v950
          %v952 = vstv %s951
          %v953 = vrcp.pop %v823
          %v954 = vmul.f32 %v823, %v953
          %v955 = vsub.f32 1.0, %v954
          %v956 = vmul.f32 %v953, %v955
          %v957 = vadd.f32 %v953, %v956
          %vm958 = vweird.f32 %v823
          %vm959 = vweird.f32 %v953
          %vm960 = vmor %vm958, %vm959
          %v961 = vsel %vm960, %v953, %v957
          %v962 = vand.u32 2147483647, %v823
          %vm963 = vcmp.eq.f32.partialorder %v962, 8.507059e+37
          %v964 = vand.u32 %v823, 2147483648
          %v965 = vor.u32 1.1754944e-38, %v964
          %v966 = vsel %vm963, %v965, %v961
          %v967 = vmul.f32 %v952, %v966
          %vm968 = vcmask 0
          %969 = vst.msk [vmem:[#allocation6] sm:$0x1] %vm968, %v967
          %970 = vst.msk [vmem:[%s4] sm:$0xff] %vm805, %v836
          %971 = vst.msk [vmem:[%s4 + $0x8] sm:$0xff] %vm805, %v837
          %972 = vst.msk [vmem:[%s4 + $0x10] sm:$0xff] %vm805, %v838
          %973 = vst.msk [vmem:[%s4 + $0x18] sm:$0x3f] %vm811, %v839
        $region44: #{tpu_custom_call.1} parent=31 // pred_fallthru
          _
        // Predicated region
        $region45: #{tpu_custom_call.1} parent=31 // pred_check
          %p974 = pneg %p106
        $region46: #{tpu_custom_call.1} parent=31 // pred_check_branch
          %976 = sbr.rel (%p974) target = $region48
        $region47: #{tpu_custom_call.1} parent=31 // pred_region
          %978 = vsyncadd [#allocation5], 0
          %s980 = sshll.u32 [#allocation6], 4
          %s981 = int_to_ptr.vmem [resolvable:$true] %s980
          %s982 = sshll.u32 %s3, 4
          %s983 = int_to_ptr.hbm [resolvable:$true] %s982
          %985 = dma.vmem_to_hbm [thread:$0]  %s981, 16, %s983, [#allocation5]
        $region48: #{tpu_custom_call.1} parent=31 // pred_fallthru
          _
        // Predicated region
        $region49: #{tpu_custom_call.1} parent=31 // pred_check
          %p986 = pneg %p127
        $region50: #{tpu_custom_call.1} parent=31 // pred_check_branch
          %988 = sbr.rel (%p986) target = $region52
        $region51: #{tpu_custom_call.1} parent=31 // pred_region
          _
        $region52: #{tpu_custom_call.1} parent=31 // pred_fallthru
          _
        // Predicated region
        $region53: #{tpu_custom_call.1} parent=31 // pred_check
          %p989 = pneg %p106
        $region54: #{tpu_custom_call.1} parent=31 // pred_check_branch
          %991 = sbr.rel (%p989) target = $region56
        $region55: #{tpu_custom_call.1} parent=31 // pred_region
          %993 = dma.done [#allocation5], 16
        $region56: #{tpu_custom_call.1} parent=31 // pred_fallthru
          _
        // Predicated region
        $region57: #{tpu_custom_call.1} parent=31 // pred_check
          %p994 = pneg %p127
        $region58: #{tpu_custom_call.1} parent=31 // pred_check_branch
          %996 = sbr.rel (%p994) target = $region60
        $region59: #{tpu_custom_call.1} parent=31 // pred_region
          _
        $region60: #{tpu_custom_call.1} parent=31 // pred_fallthru
          _
      $region32: #{tpu_custom_call.1} parent=5 // pred_fallthru
        _
      %p997 = scmp.le.s32.totalorder 2, %s15
      // Predicated region
      $region61: #{tpu_custom_call.1} parent=5 // pred_check
        %p998 = pneg %p997
      $region62: #{tpu_custom_call.1} parent=5 // pred_check_branch
        %1000 = sbr.rel (%p998) target = $region64
      $region63: #{tpu_custom_call.1} parent=5 // pred_region
        %s1001 = ssub.s32 %s15, 2
      $region64: #{tpu_custom_call.1} parent=5 // pred_fallthru
        _
    $region6: #{tpu_custom_call.1} parent=1 // loop_footer
      %s19 = sadd.s32 1, %s15
    $region7: #{tpu_custom_call.1} parent=1 // loop_footer_branch
      %14 = sbr.rel target = $region3
    $region8: #{tpu_custom_call.1} parent=1 // loop_exit
      _
    %1002 = vsyncpa [#allocation4], 1
    %s1003 = scalar_lea.sflag [#allocation4], 1
    %1004 = vsyncpa %s1003, 1
    %1005 = vsyncpa [#allocation5], 1
    %s1006 = scalar_lea.sflag [#allocation5], 1
    %1007 = vsyncpa %s1006, 1

</llo_original>
